<compile_context>
chip_gen: v6e
topology: v6e:2x2x1
jax: 0.10.0
libtpu: 0.0.40
codegen_flags: <defaults>
</compile_context>

<pallas_src>
import functools

import jax
import jax.numpy as jnp
from jax.experimental import pallas as pl
from jax.experimental.pallas import tpu as pltpu


def _tv_loss_kernel(x_ref, wh_ref, ww_ref, out_ref, *, sh_h, sh_w):
    """One row-block of the flattened (B*C, H*W) tensor -> one scalar partial."""
    x = x_ref[...]                                     # (TR, HW), native dtype
    # Rolls run on the raw (possibly bf16) data: fewer vregs through the XLU.
    xh = pltpu.roll(x, sh_h, axis=1) if sh_h else x    # x[k+W] -> lane k
    xw = pltpu.roll(x, sh_w, axis=1) if sh_w else x    # x[k+1] -> lane k

    xf = x.astype(jnp.float32)
    dh = xh.astype(jnp.float32) - xf
    dw = xw.astype(jnp.float32) - xf

    # wh/ww already contain the neighbour-validity mask folded with the static
    # 1/count_h and 1/count_w scales (host precomputed, resident in VMEM).
    out_ref[0, 0] = jnp.sum(dh * dh * wh_ref[...] + dw * dw * ww_ref[...])


def _round_up(a, b):
    return ((a + b - 1) // b) * b


def _pick_vmem_limit_bytes():
    """Scoped-VMEM request adapted to the chip generation (capped for v7x)."""
    default = 48 * 1024 * 1024
    try:
        cap = getattr(pltpu.get_tpu_info(), "vmem_capacity_bytes", None)
    except Exception:
        return default
    if not cap:
        return default
    # Half the physical VMEM, clamped to [32, 64] MiB: 64 MiB on v5e/v6e
    # (128 MiB physical), 32 MiB on v7x (64 MiB per TensorCore) -- plenty for
    # ~2 MiB double-buffered blocks plus the elementwise f32 temps.
    return int(min(max(cap // 2, 32 * 1024 * 1024), 64 * 1024 * 1024))


def tv_loss(x, *, block_bytes=2 * 1024 * 1024):
    B, C, H, W = x.shape
    HW = H * W
    R = B * C

    # Lane-dense layout: every row is one flattened (H*W) channel plane.
    x2d = x.reshape(R, HW)
    itemsize = jnp.dtype(x2d.dtype).itemsize

    count_h = C * (H - 1) * W
    count_w = C * H * (W - 1)
    inv_ch = (1.0 / count_h) if count_h > 0 else 0.0
    inv_cw = (1.0 / count_w) if count_w > 0 else 0.0

    # Host-precomputed weight vectors: validity mask (under the jnp.roll
    # convention of pltpu.roll) folded with the 1/count_* scales.
    k = jnp.arange(HW, dtype=jnp.int32)
    wh = jnp.where(k // W < H - 1, jnp.float32(inv_ch), jnp.float32(0.0))
    ww = jnp.where(k % W < W - 1, jnp.float32(inv_cw), jnp.float32(0.0))
    wh = wh.reshape(1, HW)
    ww = ww.reshape(1, HW)

    # Roll shifts (kept non-negative): bring x[k+W] / x[k+1] into lane k.
    sh_h = (HW - W) % HW
    sh_w = (HW - 1) % HW

    # --- Row tiling -------------------------------------------------------
    # Rows (channel planes) are independent, so no halo is needed.  Pick the
    # largest multiple-of-8 row count that keeps each input block ~block_bytes
    # (~2 MiB default: big enough to sit near the HBM roofline, small enough
    # for v7x's 64 MiB VMEM with double-buffering + f32 temps).
    bytes_per_row = max(HW * itemsize, 1)
    max_rows = max(8, (block_bytes // bytes_per_row) // 8 * 8)
    r8 = _round_up(R, 8)
    tr = min(r8, max_rows)
    if r8 > 8 and r8 <= max_rows:
        # Enough work to split but it would fit in one block: force >=2 grid
        # steps so both v7x TensorCores (parallel grid axis) are used.
        tr = max(8, _round_up(pl.cdiv(r8, 2), 8))
    grid0 = pl.cdiv(R, tr)
    r_pad = grid0 * tr
    if r_pad != R:
        # Zero rows have zero neighbour differences -> contribute exactly 0.
        x2d = jnp.pad(x2d, ((0, r_pad - R), (0, 0)))
    grid = (grid0,)

    kernel = functools.partial(_tv_loss_kernel, sh_h=sh_h, sh_w=sh_w)

    # Advisory cost: pure streaming, ~8 VALU ops / element, no transcendentals.
    cost = pl.CostEstimate(
        flops=8 * r_pad * HW,
        transcendentals=0,
        bytes_accessed=r_pad * HW * itemsize + 2 * HW * 4 + grid0 * 4,
    )

    partials = pl.pallas_call(
        kernel,
        out_shape=jax.ShapeDtypeStruct((grid0, 1), jnp.float32),
        grid_spec=pltpu.PrefetchScalarGridSpec(
            num_scalar_prefetch=0,
            grid=grid,
            in_specs=[
                pl.BlockSpec((tr, HW), lambda g: (g, 0)),      # streamed x block
                pl.BlockSpec((1, HW), lambda g: (0, 0)),       # resident weights
                pl.BlockSpec((1, HW), lambda g: (0, 0)),       # resident weights
            ],
            # One scalar partial per grid step: no cross-step accumulator, so
            # the grid axis can be sharded across TensorCores.
            out_specs=pl.BlockSpec((1, 1), lambda g: (g, 0),
                                   memory_space=pltpu.SMEM),
        ),
        compiler_params=pltpu.CompilerParams(
            dimension_semantics=("parallel",),
            vmem_limit_bytes=_pick_vmem_limit_bytes(),
        ),
        cost_estimate=cost,
    )(x2d, wh, ww)

    # Tiny final reduction + static scale, applied once on the host side.
    return (2.0 / B) * jnp.sum(partials)


def tv_loss_ref(x):
    x = x.astype(jnp.float32)
    B, C, H, W = x.shape
    count_h = C * (H - 1) * W
    count_w = C * H * (W - 1)
    h_tv = jnp.sum((x[:, :, 1:, :] - x[:, :, :H - 1, :]) ** 2)
    w_tv = jnp.sum((x[:, :, :, 1:] - x[:, :, :, :W - 1]) ** 2)
    return 2.0 * (h_tv / count_h + w_tv / count_w) / B


if __name__ == "__main__":
    key = jax.random.PRNGKey(0)
    x = jax.random.normal(key, (2, 4, 16, 16), dtype=jnp.float32)

    out = tv_loss(x)
    jax.block_until_ready(out)
    ref = tv_loss_ref(x)
    assert jnp.allclose(out, ref, rtol=1e-5, atol=1e-6), (out, ref)

    # Also exercise the padded / multi-step parallel-grid path (R=15 rows,
    # tiny forced block) to validate the cdiv tiling + zero-row padding.
    x2 = jax.random.normal(jax.random.PRNGKey(1), (3, 5, 8, 16), dtype=jnp.float32)
    out2 = tv_loss(x2, block_bytes=4096)
    jax.block_until_ready(out2)
    ref2 = tv_loss_ref(x2)
    assert jnp.allclose(out2, ref2, rtol=1e-5, atol=1e-6), (out2, ref2)

    print("KERNEL_OK")
</pallas_src>

<mosaic_0001>
module attributes {stable_mosaic.version = 11 : i64} {
  func.func @_tv_loss_kernel(%arg0: i32, %arg1: memref<8x256xf32, #tpu.memory_space<vmem>>, %arg2: memref<1x256xf32, #tpu.memory_space<vmem>>, %arg3: memref<1x256xf32, #tpu.memory_space<vmem>>, %arg4: memref<1x1xf32, #tpu.memory_space<smem>>) attributes {dimension_semantics = [#tpu.dimension_semantics<parallel>], iteration_bounds = array<i64: 1>, scalar_prefetch = 0 : i64, scratch_operands = 0 : i64, tpu.core_type = #tpu.core_type<tc>, window_params = [{transform_indices = @transform_0, window_bounds = array<i64: 8, 256>}, {pipeline_mode = #tpu.pipeline_mode<synchronous>, transform_indices = @transform_1, window_bounds = array<i64: 1, 256>}, {pipeline_mode = #tpu.pipeline_mode<synchronous>, transform_indices = @transform_2, window_bounds = array<i64: 1, 256>}, {transform_indices = @transform_3, window_bounds = array<i64: 1, 1>}]} {
    %c0 = arith.constant 0 : index
    %c0_0 = arith.constant 0 : index
    %0 = vector.load %arg1[%c0, %c0_0] : memref<8x256xf32, #tpu.memory_space<vmem>>, vector<8x256xf32>
    %c240_i32 = arith.constant 240 : i32
    %1 = tpu.dynamic_rotate %0 by %c240_i32 dim 1 : vector<8x256xf32>, i32 -> vector<8x256xf32>
    %c255_i32 = arith.constant 255 : i32
    %2 = tpu.dynamic_rotate %0 by %c255_i32 dim 1 : vector<8x256xf32>, i32 -> vector<8x256xf32>
    %3 = arith.subf %1, %0 : vector<8x256xf32>
    %4 = arith.subf %2, %0 : vector<8x256xf32>
    %5 = arith.mulf %3, %3 : vector<8x256xf32>
    %c0_1 = arith.constant 0 : index
    %c0_2 = arith.constant 0 : index
    %6 = vector.load %arg2[%c0_1, %c0_2] : memref<1x256xf32, #tpu.memory_space<vmem>>, vector<1x256xf32>
    %7 = vector.broadcast %6 : vector<1x256xf32> to vector<8x256xf32>
    %8 = arith.mulf %5, %7 : vector<8x256xf32>
    %9 = arith.mulf %4, %4 : vector<8x256xf32>
    %c0_3 = arith.constant 0 : index
    %c0_4 = arith.constant 0 : index
    %10 = vector.load %arg3[%c0_3, %c0_4] : memref<1x256xf32, #tpu.memory_space<vmem>>, vector<1x256xf32>
    %11 = vector.broadcast %10 : vector<1x256xf32> to vector<8x256xf32>
    %12 = arith.mulf %9, %11 : vector<8x256xf32>
    %13 = arith.addf %8, %12 : vector<8x256xf32>
    %14 = vector.shape_cast %13 : vector<8x256xf32> to vector<1x8x256xf32>
    %cst = arith.constant dense<0.000000e+00> : vector<1xf32>
    %15 = vector.multi_reduction <add>, %14, %cst [1, 2] : vector<1x8x256xf32> to vector<1xf32>
    %16 = vector.shape_cast %15 : vector<1xf32> to vector<1x1x1xf32>
    %17 = vector.extract %16[0, 0, 0] : f32 from vector<1x1x1xf32>
    %c0_5 = arith.constant 0 : index
    %c0_6 = arith.constant 0 : index
    %18 = memref.load %arg4[%c0_5, %c0_6] : memref<1x1xf32, #tpu.memory_space<smem>>
    memref.store %17, %arg4[%c0_5, %c0_6] : memref<1x1xf32, #tpu.memory_space<smem>>
    return
  }
  func.func @transform_0(%arg0: i32) -> (i32, i32) {
    %c0_i32 = arith.constant 0 : i32
    %c0_i32_0 = arith.constant 0 : i32
    return %arg0, %c0_i32 : i32, i32
  }
  func.func @transform_1(%arg0: i32) -> (i32, i32) {
    %c0_i32 = arith.constant 0 : i32
    %c0_i32_0 = arith.constant 0 : i32
    %c0_i32_1 = arith.constant 0 : i32
    return %c0_i32, %c0_i32_0 : i32, i32
  }
  func.func @transform_2(%arg0: i32) -> (i32, i32) {
    %c0_i32 = arith.constant 0 : i32
    %c0_i32_0 = arith.constant 0 : i32
    %c0_i32_1 = arith.constant 0 : i32
    return %c0_i32, %c0_i32_0 : i32, i32
  }
  func.func @transform_3(%arg0: i32) -> (i32, i32) {
    %c0_i32 = arith.constant 0 : i32
    %c0_i32_0 = arith.constant 0 : i32
    return %arg0, %c0_i32 : i32, i32
  }
}

</mosaic_0001>

<llo_original>
// kernel: tpu_custom_call.1
$region0: #{tpu_custom_call.1}
  #allocation0 [shape = 'u32[]', space=smem, size = 0x4, offset = 0x4, fixed_abs, tag = 'smem constant byte address 0x4 - core index']
  #allocation1 [shape = 'u32[144,128]{1,0:T(1,128)}', space=vmem, size = 0x12000, scoped, tag = 'internal scratch']
  %s0 = inlined_call_operand.hbm [shape: f32[8,256], index: 0, kind: input, shape index: {}]
  %s1 = inlined_call_operand.hbm [shape: f32[1,256], index: 1, kind: input, shape index: {}]
  %s2 = inlined_call_operand.vmem [shape: f32[1,256], index: 2, kind: input, shape index: {}]
  %s3 = inlined_call_operand.hbm [shape: f32[1,1], index: 3, kind: output, shape index: {}]
  %s4 = sld [smem:[#allocation0]]
  $region30: #{tpu_custom_call.1} parent=0
    _
  %s6 = ssub.s32 1, %s4
  %s7 = scalar_select 0, %s6, %s4
  $region1: #{tpu_custom_call.1} parent=0
    #allocation2 [shape = 'u8[8192]{0}', space=vmem, size = 0x2000, scoped, tag = 'input window, operand 0, single buffered']
    #allocation3 [shape = 's32[1]{0}', space=sflag, size = 0x4, scoped, tag = 'scoped memory for tpu_custom_call.1']
    #allocation4 [shape = 's32[1]{0}', space=sflag, size = 0x4, scoped, tag = 'scoped memory for tpu_custom_call.1']
    #allocation5 [shape = 'u8[1024]{0}', space=vmem, size = 0x400, scoped, tag = 'input window, operand 1, single buffered']
    #allocation6 [shape = 's32[1]{0}', space=sflag, size = 0x4, scoped, tag = 'scoped memory for tpu_custom_call.1']
    #allocation7 [shape = 'u8[512]{0}', space=smem, size = 0x200, scoped, tag = 'output window, operand 0, single buffered']
    %8 = vsyncpa [#allocation3], 0
    %9 = vsyncpa [#allocation6], 0
    %10 = vsyncpa [#allocation4], 0
    // Predicated region
    $region2: #{tpu_custom_call.1} parent=1 // pred_check
      _
    $region3: #{tpu_custom_call.1} parent=1 // pred_check_branch
      %12 = sbr.rel (0) target = $region5
    $region4: #{tpu_custom_call.1} parent=1 // pred_region
      %s14 = ssub.s32 256, 256
      %15 = vsyncadd [#allocation3], %s14
      %s17 = sshll.u32 [#allocation2], 4
      %s18 = int_to_ptr.vmem [resolvable:$true] %s17
      %20 = dma.hbm_to_vmem [thread:$0]  %s0, 256, %s18, [#allocation3]
    $region5: #{tpu_custom_call.1} parent=1 // pred_fallthru
      _
    // Predicated region
    $region6: #{tpu_custom_call.1} parent=1 // pred_check
      _
    $region7: #{tpu_custom_call.1} parent=1 // pred_check_branch
      %22 = sbr.rel (0) target = $region9
    $region8: #{tpu_custom_call.1} parent=1 // pred_region
      %s24 = ssub.s32 32, 32
      %25 = vsyncadd [#allocation6], %s24
      %s27 = sshll.u32 [#allocation5], 4
      %s28 = int_to_ptr.vmem [resolvable:$true] %s27
      %30 = dma.hbm_to_vmem [thread:$0]  %s1, 32, %s28, [#allocation6]
    $region9: #{tpu_custom_call.1} parent=1 // pred_fallthru
      _
    // Predicated region
    $region10: #{tpu_custom_call.1} parent=1 // pred_check
      _
    $region11: #{tpu_custom_call.1} parent=1 // pred_check_branch
      %32 = sbr.rel (0) target = $region13
    $region12: #{tpu_custom_call.1} parent=1 // pred_region
      _
    $region13: #{tpu_custom_call.1} parent=1 // pred_fallthru
      _
    // Predicated region
    $region14: #{tpu_custom_call.1} parent=1 // pred_check
      _
    $region15: #{tpu_custom_call.1} parent=1 // pred_check_branch
      %34 = sbr.rel (0) target = $region17
    $region16: #{tpu_custom_call.1} parent=1 // pred_region
      %35 = dma.done [#allocation3], 256
    $region17: #{tpu_custom_call.1} parent=1 // pred_fallthru
      _
    // Predicated region
    $region18: #{tpu_custom_call.1} parent=1 // pred_check
      _
    $region19: #{tpu_custom_call.1} parent=1 // pred_check_branch
      %37 = sbr.rel (0) target = $region21
    $region20: #{tpu_custom_call.1} parent=1 // pred_region
      %38 = dma.done [#allocation6], 32
    $region21: #{tpu_custom_call.1} parent=1 // pred_fallthru
      _
    %v39 = vld [vmem:[#allocation2] sm:$0xff]
    %v40 = vld [vmem:[#allocation2 + $0x8] sm:$0xff]
    %41 = vrot.lane.b32.xlu0 %v39, 112
    %v42 = vpop.permute.xlu0 %41
    %43 = vrot.lane.b32.xlu0 %v40, 112
    %v44 = vpop.permute.xlu0 %43
    %v45 = vlaneseq
    %v46 = vand.u32 %v45, 127
    %vm47 = vcmp.lt.s32.totalorder %v46, 112
    %v48 = vsel %vm47, %v42, %v44
    %v49 = vsel %vm47, %v44, %v42
    %50 = vrot.lane.b32.xlu0 %v39, 127
    %v51 = vpop.permute.xlu0 %50
    %52 = vrot.lane.b32.xlu0 %v40, 127
    %v53 = vpop.permute.xlu0 %52
    %vm54 = vcmp.lt.s32.totalorder %v46, 127
    %v55 = vsel %vm54, %v51, %v53
    %v56 = vsel %vm54, %v53, %v51
    %v57 = vsub.f32 %v48, %v39
    %v58 = vsub.f32 %v49, %v40
    %v59 = vsub.f32 %v55, %v39
    %v60 = vsub.f32 %v56, %v40
    %v61 = vmul.f32 %v57, %v57
    %v62 = vmul.f32 %v58, %v58
    %v63 = vld [vmem:[#allocation5] sm:$0x3]
    %v65 = vlaneseq
    %v66 = vshrl.u32 %v65, 7
    %v67 = vsub.s32 0, %v66
    %v68 = vrot.slane %v63, %v67
    %v69 = vlaneseq
    %v70 = vshrl.u32 %v69, 7
    %v71 = vsub.s32 1, %v70
    %v72 = vrot.slane %v63, %v71
    %v75 = vmul.f32 %v61, %v68
    %v76 = vmul.f32 %v62, %v72
    %v77 = vmul.f32 %v59, %v59
    %v78 = vmul.f32 %v60, %v60
    %v79 = vld [vmem:[%s2] sm:$0x3]
    %v81 = vlaneseq
    %v82 = vshrl.u32 %v81, 7
    %v83 = vsub.s32 0, %v82
    %v84 = vrot.slane %v79, %v83
    %v85 = vlaneseq
    %v86 = vshrl.u32 %v85, 7
    %v87 = vsub.s32 1, %v86
    %v88 = vrot.slane %v79, %v87
    %v91 = vmul.f32 %v77, %v84
    %v92 = vmul.f32 %v78, %v88
    %v93 = vadd.f32 %v75, %v91
    %v94 = vadd.f32 %v76, %v92
    %v95 = vadd.f32 %v93, %v94
    %96 = vadd.xlane.f32.xlu0 %v95
    %v97 = vpop.xlane.xlu0 %96
    %v98 = vrot.slane %v97, 4
    %v99 = vadd.f32 %v97, %v98
    %v100 = vrot.slane %v99, 2
    %v101 = vadd.f32 %v99, %v100
    %v102 = vrot.slane %v101, 1
    %v103 = vadd.f32 %v101, %v102
    %s104 = vtos %v103
    %s105 = scalar_lea.smem [#allocation7], 0
    %106 = sst [smem:[%s105]] %s104
    // Predicated region
    $region22: #{tpu_custom_call.1} parent=1 // pred_check
      _
    $region23: #{tpu_custom_call.1} parent=1 // pred_check_branch
      %108 = sbr.rel (0) target = $region25
    $region24: #{tpu_custom_call.1} parent=1 // pred_region
      %s110 = ssub.s32 16, 16
      %111 = vsyncadd [#allocation4], %s110
      %114 = dma.smem_to_hbm [#allocation7], 16, %s3, [#allocation4]
    $region25: #{tpu_custom_call.1} parent=1 // pred_fallthru
      _
    // Predicated region
    $region26: #{tpu_custom_call.1} parent=1 // pred_check
      _
    $region27: #{tpu_custom_call.1} parent=1 // pred_check_branch
      %116 = sbr.rel (0) target = $region29
    $region28: #{tpu_custom_call.1} parent=1 // pred_region
      %117 = dma.done [#allocation4], 16
    $region29: #{tpu_custom_call.1} parent=1 // pred_fallthru
      _
    %118 = sfence
    %119 = vsyncpa [#allocation3], 1
    %120 = vsyncpa [#allocation6], 1
    %121 = vsyncpa [#allocation4], 1

</llo_original>
